<compile_context>
chip_gen: v7x
topology: tpu7x:2x2x1
jax: 0.10.0
libtpu: 0.0.40
codegen_flags: <defaults>
</compile_context>

<pallas_src>
import functools

import jax
import jax.numpy as jnp
from jax.experimental import pallas as pl
from jax.experimental.pallas import tpu as pltpu

ACT_DTYPE = jnp.bfloat16          # HBM-resident activations / MXU inputs
EPS = 1e-5                        # PyTorch BatchNorm2d default eps
TM_MAX = 1024                     # max row tile for (M, C) kernels
VMEM_LIMIT = 32 * 1024 * 1024     # explicit VMEM budget (safe on v5e/v6e/v7x)


def _compiler_params():
    return pltpu.CompilerParams(dimension_semantics=("parallel",),
                                vmem_limit_bytes=VMEM_LIMIT)


def _row_tile(m):
    return m if m <= TM_MAX else TM_MAX


# ----------------------------- Pallas kernel bodies -------------------------

def _conv3x3_kernel(xp_ref, w_ref, y_ref, sum_ref, sq_ref, *, height, width):
    """Fused 3x3 stride-1 conv (bias-free) for one batch image + BN stats.

    xp_ref : (1, H+2, W+2, Cin)  spatially padded input (bf16)
    w_ref  : (9, Cin, Cout)      tap-major weights (bf16)
    y_ref  : (1, H, W, Cout)     conv output (bf16)
    sum_ref/sq_ref : (1, 1, Cout) per-image per-channel sum / sum-of-squares (f32)
    """
    cout = y_ref.shape[-1]

    def row_body(h, carry):
        s, q = carry
        acc = jnp.zeros((width, cout), jnp.float32)
        for di in range(3):
            for dj in range(3):
                lhs = xp_ref[0, h + di, pl.ds(dj, width), :]      # (W, Cin)
                acc = acc + jnp.dot(lhs, w_ref[di * 3 + dj, :, :],
                                    preferred_element_type=jnp.float32)
        y_ref[0, h, :, :] = acc.astype(y_ref.dtype)
        s = s + jnp.sum(acc, axis=0, keepdims=True)
        q = q + jnp.sum(acc * acc, axis=0, keepdims=True)
        return s, q

    stats = (jnp.zeros((1, cout), jnp.float32),
             jnp.zeros((1, cout), jnp.float32))
    if height <= 16:                      # small images: fully static unroll
        for h in range(height):
            stats = row_body(h, stats)
    else:                                 # large images: keep the trace small
        stats = jax.lax.fori_loop(0, height, row_body, stats)
    sum_ref[0, :, :] = stats[0]
    sq_ref[0, :, :] = stats[1]


def _matmul_kernel(a_ref, w_ref, b_ref, o_ref, *stat_refs,
                   relu, with_stats, m_total):
    acc = jnp.dot(a_ref[...], w_ref[...], preferred_element_type=jnp.float32)
    acc = acc + b_ref[...]
    if relu:
        acc = jnp.maximum(acc, 0.0)
    o_ref[...] = acc.astype(o_ref.dtype)
    if with_stats:
        sum_ref, sq_ref = stat_refs
        tm = acc.shape[0]
        if m_total % tm != 0:   # mask garbage rows of a partial last tile
            rows = jax.lax.broadcasted_iota(jnp.int32, (tm, 1), 0)
            valid = rows < (m_total - pl.program_id(0) * tm)
            acc = jnp.where(valid, acc, 0.0)
        sum_ref[0, :, :] = jnp.sum(acc, axis=0, keepdims=True)
        sq_ref[0, :, :] = jnp.sum(acc * acc, axis=0, keepdims=True)


def _bn_apply_kernel(*refs, relu, add_res):
    if add_res:
        x_ref, res_ref, s_ref, b_ref, o_ref = refs
    else:
        x_ref, s_ref, b_ref, o_ref = refs
    y = x_ref[...].astype(jnp.float32) * s_ref[...] + b_ref[...]
    if add_res:
        y = y + res_ref[...].astype(jnp.float32)
    if relu:
        y = jnp.maximum(y, 0.0)
    o_ref[...] = y.astype(o_ref.dtype)


# ------------------------------ kernel wrappers ------------------------------

def conv3x3_fused(x_nhwc, w_taps):
    """3x3 stride-1 pad-1 conv (no bias) with fused per-channel BN statistics."""
    n, h, w, c_in = x_nhwc.shape
    c_out = w_taps.shape[-1]
    xp = jnp.pad(x_nhwc, ((0, 0), (1, 1), (1, 1), (0, 0)))   # small halo pad
    hp, wp = h + 2, w + 2
    flops = 2 * n * h * w * 9 * c_in * c_out
    bytes_accessed = 2 * (xp.size + w_taps.size + n * h * w * c_out)
    y, s, q = pl.pallas_call(
        functools.partial(_conv3x3_kernel, height=h, width=w),
        grid=(n,),
        in_specs=[
            pl.BlockSpec((1, hp, wp, c_in), lambda i: (i, 0, 0, 0)),
            pl.BlockSpec((9, c_in, c_out), lambda i: (0, 0, 0)),
        ],
        out_specs=(
            pl.BlockSpec((1, h, w, c_out), lambda i: (i, 0, 0, 0)),
            pl.BlockSpec((1, 1, c_out), lambda i: (i, 0, 0)),
            pl.BlockSpec((1, 1, c_out), lambda i: (i, 0, 0)),
        ),
        out_shape=(
            jax.ShapeDtypeStruct((n, h, w, c_out), ACT_DTYPE),
            jax.ShapeDtypeStruct((n, 1, c_out), jnp.float32),
            jax.ShapeDtypeStruct((n, 1, c_out), jnp.float32),
        ),
        compiler_params=_compiler_params(),
        cost_estimate=pl.CostEstimate(flops=flops, transcendentals=0,
                                      bytes_accessed=bytes_accessed),
    )(xp, w_taps)
    # tiny (per-image partial) reduction done in JAX
    return y, jnp.sum(s, axis=0), jnp.sum(q, axis=0)


def matmul_bias(a, w, bias, relu=False, with_stats=False):
    """(M, K) @ (K, N) + bias, optional fused ReLU and fused BN statistics."""
    m, k = a.shape
    n = w.shape[1]
    tm = _row_tile(m)
    grid_m = pl.cdiv(m, tm)
    y_shape = jax.ShapeDtypeStruct((m, n), ACT_DTYPE)
    y_spec = pl.BlockSpec((tm, n), lambda i: (i, 0))
    if with_stats:
        s_shape = jax.ShapeDtypeStruct((grid_m, 1, n), jnp.float32)
        s_spec = pl.BlockSpec((1, 1, n), lambda i: (i, 0, 0))
        out_shape = (y_shape, s_shape, s_shape)
        out_specs = (y_spec, s_spec, s_spec)
    else:
        out_shape = y_shape
        out_specs = y_spec
    flops = 2 * m * k * n
    bytes_accessed = 2 * (m * k + k * n + m * n) + 4 * n
    res = pl.pallas_call(
        functools.partial(_matmul_kernel, relu=relu, with_stats=with_stats,
                          m_total=m),
        grid=(grid_m,),
        in_specs=[
            pl.BlockSpec((tm, k), lambda i: (i, 0)),
            pl.BlockSpec((k, n), lambda i: (0, 0)),
            pl.BlockSpec((1, n), lambda i: (0, 0)),
        ],
        out_specs=out_specs,
        out_shape=out_shape,
        compiler_params=_compiler_params(),
        cost_estimate=pl.CostEstimate(flops=flops, transcendentals=0,
                                      bytes_accessed=bytes_accessed),
    )(a, w, bias)
    if with_stats:
        y, s, q = res
        return y, jnp.sum(s, axis=0), jnp.sum(q, axis=0)
    return res


def bn_apply(x_2d, scale, shift, residual=None, relu=False):
    """Fused y = x*scale + shift (+residual)(+ReLU) over an (M, C) slab."""
    m, c = x_2d.shape
    tm = _row_tile(m)
    add_res = residual is not None
    in_specs = [pl.BlockSpec((tm, c), lambda i: (i, 0))]
    args = [x_2d]
    if add_res:                       # no dummy residual DMA when absent
        in_specs.append(pl.BlockSpec((tm, c), lambda i: (i, 0)))
        args.append(residual)
    in_specs += [pl.BlockSpec((1, c), lambda i: (0, 0)),
                 pl.BlockSpec((1, c), lambda i: (0, 0))]
    args += [scale, shift]
    return pl.pallas_call(
        functools.partial(_bn_apply_kernel, relu=relu, add_res=add_res),
        grid=(pl.cdiv(m, tm),),
        in_specs=in_specs,
        out_specs=pl.BlockSpec((tm, c), lambda i: (i, 0)),
        out_shape=jax.ShapeDtypeStruct((m, c), ACT_DTYPE),
        compiler_params=_compiler_params(),
    )(*args)


def bn_affine(sums, sqs, count, gamma, beta):
    """Tiny (1, C) math: fold BN stats + gamma/beta into scale/shift (f32)."""
    mean = sums / count
    var = jnp.maximum(sqs / count - mean * mean, 0.0)   # clamp tiny negatives
    inv = jax.lax.rsqrt(var + EPS)
    scale = gamma * inv
    shift = beta - mean * scale
    return scale, shift


# ------------------------------ conv plumbing --------------------------------

def im2col(x_nhwc, kh, kw, stride, pad):
    """JAX-side patch extraction, only used for the strided convs."""
    x = jnp.pad(x_nhwc, ((0, 0), (pad, pad), (pad, pad), (0, 0)))
    n, h, w, c = x.shape
    ho = (h - kh) // stride + 1
    wo = (w - kw) // stride + 1
    cols = []
    for i in range(kh):
        for j in range(kw):
            cols.append(x[:, i:i + stride * ho:stride,
                          j:j + stride * wo:stride, :])
    patches = jnp.stack(cols, axis=3)          # (N, Ho, Wo, kh*kw, C)
    return patches.reshape(n * ho * wo, kh * kw * c), (n, ho, wo)


# --------------------------- model: DWT block / encoder ----------------------

def dwt_block(flat, nhw, p):
    n, h, w = nhw
    c_in = flat.shape[1]
    identity = flat

    # conv1 (3x3, no bias) -> bn1 -> relu    (BN stats fused into the conv)
    y, s, q = conv3x3_fused(flat.reshape(n, h, w, c_in), p["w1"])
    c_out = y.shape[-1]
    scale, shift = bn_affine(s, q, n * h * w, p["g1"], p["b1"])
    out = bn_apply(y.reshape(n * h * w, c_out), scale, shift, relu=True)

    # conv2 (3x3, no bias) -> bn2
    y, s, q = conv3x3_fused(out.reshape(n, h, w, c_out), p["w2"])
    scale, shift = bn_affine(s, q, n * h * w, p["g2"], p["b2"])

    # identity path: 1x1 conv (+bias) when channel counts differ
    if p["w3"] is not None:
        identity = matmul_bias(identity, p["w3"], p["b3"])

    # bn2 apply + residual add (fused)
    out = bn_apply(y.reshape(n * h * w, c_out), scale, shift,
                   residual=identity, relu=False)

    # conv4: strided downsample conv (+bias) via im2col + Pallas matmul
    if p["w4"] is not None:
        ds = p["downsample"]
        kk = ds * 2 - 1
        patches, (n, h, w) = im2col(out.reshape(n, h, w, c_out),
                                    kk, kk, ds, ds // 2)
        out = matmul_bias(patches, p["w4"], p["b4"])
    return out, (n, h, w)


def vision_encoder(x_nchw, params):
    n, _, h, w = x_nchw.shape
    x = jnp.transpose(x_nchw, (0, 2, 3, 1)).astype(ACT_DTYPE)   # NHWC bf16
    # stem: conv7x7 s2 p3 (+bias) -> ReLU -> BatchNorm
    # (ReLU fused into the matmul; BN stats fused on the post-ReLU output)
    patches, (n, h, w) = im2col(x, 7, 7, 2, 3)
    y, s, q = matmul_bias(patches, params["stem_w"], params["stem_b"],
                          relu=True, with_stats=True)
    scale, shift = bn_affine(s, q, n * h * w,
                             params["stem_g"], params["stem_beta"])
    flat = bn_apply(y, scale, shift)
    nhw = (n, h, w)
    for bp in params["blocks"]:
        flat, nhw = dwt_block(flat, nhw, bp)
    n, h, w = nhw
    out = flat.reshape(n, h, w, -1).astype(jnp.float32)
    return jnp.transpose(out, (0, 3, 1, 2))


# ------------------------------ params init ----------------------------------

def init_conv(key, c_out, c_in, kh, kw, with_bias):
    k1, k2 = jax.random.split(key)
    fan_in = kh * kw * c_in
    w = jax.random.normal(k1, (c_out, c_in, kh, kw), jnp.float32) / jnp.sqrt(fan_in)
    b = (0.01 * jax.random.normal(k2, (c_out,), jnp.float32)
         if with_bias else None)
    return w, b


def init_dwt_block(key, c_in, c_out, downsample):
    keys = jax.random.split(key, 4)
    p = {"downsample": downsample}
    p["w1"], _ = init_conv(keys[0], c_out, c_in, 3, 3, False)
    p["g1"] = jnp.ones((c_out,), jnp.float32)
    p["b1"] = jnp.zeros((c_out,), jnp.float32)
    p["w2"], _ = init_conv(keys[1], c_out, c_out, 3, 3, False)
    p["g2"] = jnp.ones((c_out,), jnp.float32)
    p["b2"] = jnp.zeros((c_out,), jnp.float32)
    if c_in != c_out:
        p["w3"], p["b3"] = init_conv(keys[2], c_out, c_in, 1, 1, True)
    else:
        p["w3"], p["b3"] = None, None
    if downsample > 1:
        k = downsample * 2 - 1
        p["w4"], p["b4"] = init_conv(keys[3], c_out, c_out, k, k, True)
    else:
        p["w4"], p["b4"] = None, None
    return p


class Cfg:
    block = [1, 1]
    backbone_base_dim = [64, 128]


def init_encoder(key, cfg):
    keys = jax.random.split(key, 1 + sum(cfg.block))
    params = {}
    params["stem_w"], params["stem_b"] = init_conv(keys[0], 64, 3, 7, 7, True)
    params["stem_g"] = jnp.ones((64,), jnp.float32)
    params["stem_beta"] = jnp.zeros((64,), jnp.float32)
    blk_dims = [64] + list(cfg.backbone_base_dim)
    blocks = []
    ki = 1
    for i, (layers, _dim) in enumerate(zip(cfg.block, cfg.backbone_base_dim)):
        for j in range(layers):
            input_dim = blk_dims[i] if j == 0 else blk_dims[i + 1]
            output_dim = blk_dims[i + 1]
            ds = 2 if j == layers - 1 else 1
            blocks.append(init_dwt_block(keys[ki], input_dim, output_dim, ds))
            ki += 1
    params["blocks"] = blocks
    return params


def prepare_params(raw):
    """One-time conversion of PyTorch-layout params (OIHW f32) into the layouts
    the Pallas kernels consume.  Done once, off the forward hot path."""
    def taps(w):                            # OIHW -> (kh*kw, Cin, Cout) bf16
        co, ci, kh, kw = w.shape
        return jnp.transpose(w, (2, 3, 1, 0)).reshape(kh * kw, ci, co).astype(ACT_DTYPE)

    def mat(w):                             # OIHW -> (kh*kw*Cin, Cout) bf16
        co, ci, kh, kw = w.shape
        return jnp.transpose(w, (2, 3, 1, 0)).reshape(kh * kw * ci, co).astype(ACT_DTYPE)

    def vec(v):                             # (C,) -> (1, C) f32
        return v.reshape(1, -1).astype(jnp.float32)

    out = {
        "stem_w": mat(raw["stem_w"]), "stem_b": vec(raw["stem_b"]),
        "stem_g": vec(raw["stem_g"]), "stem_beta": vec(raw["stem_beta"]),
        "blocks": [],
    }
    for rb in raw["blocks"]:
        out["blocks"].append({
            "downsample": rb["downsample"],
            "w1": taps(rb["w1"]), "g1": vec(rb["g1"]), "b1": vec(rb["b1"]),
            "w2": taps(rb["w2"]), "g2": vec(rb["g2"]), "b2": vec(rb["b2"]),
            "w3": mat(rb["w3"]) if rb["w3"] is not None else None,
            "b3": vec(rb["b3"]) if rb["b3"] is not None else None,
            "w4": mat(rb["w4"]) if rb["w4"] is not None else None,
            "b4": vec(rb["b4"]) if rb["b4"] is not None else None,
        })
    return out


if __name__ == "__main__":
    key = jax.random.PRNGKey(0)
    kp, kx = jax.random.split(key)
    cfg = Cfg()
    raw = init_encoder(kp, cfg)
    params = prepare_params(raw)            # pre-transposed / pre-cast once
    x = jax.random.normal(kx, (2, 3, 16, 16), jnp.float32)   # NCHW like PyTorch
    out = vision_encoder(x, params)
    jax.block_until_ready(out)
    assert out.shape == (2, 128, 2, 2), out.shape
    print("KERNEL_OK")
</pallas_src>

<mosaic_0001>
module attributes {stable_mosaic.version = 11 : i64} {
  func.func @_matmul_kernel(%arg0: i32, %arg1: memref<128x147xbf16, #tpu.memory_space<vmem>>, %arg2: memref<147x64xbf16, #tpu.memory_space<vmem>>, %arg3: memref<1x64xf32, #tpu.memory_space<vmem>>, %arg4: memref<128x64xbf16, #tpu.memory_space<vmem>>, %arg5: memref<1x1x64xf32, #tpu.memory_space<vmem>>, %arg6: memref<1x1x64xf32, #tpu.memory_space<vmem>>) attributes {dimension_semantics = [#tpu.dimension_semantics<parallel>], iteration_bounds = array<i64: 1>, scalar_prefetch = 0 : i64, scratch_operands = 0 : i64, tpu.core_type = #tpu.core_type<tc>, window_params = [{transform_indices = @transform_0, window_bounds = array<i64: 128, 147>}, {pipeline_mode = #tpu.pipeline_mode<synchronous>, transform_indices = @transform_1, window_bounds = array<i64: 147, 64>}, {pipeline_mode = #tpu.pipeline_mode<synchronous>, transform_indices = @transform_2, window_bounds = array<i64: 1, 64>}, {transform_indices = @transform_3, window_bounds = array<i64: 128, 64>}, {transform_indices = @transform_4, window_bounds = array<i64: 1, 1, 64>}, {transform_indices = @transform_5, window_bounds = array<i64: 1, 1, 64>}]} {
    %c0 = arith.constant 0 : index
    %c0_0 = arith.constant 0 : index
    %0 = vector.load %arg1[%c0, %c0_0] : memref<128x147xbf16, #tpu.memory_space<vmem>>, vector<128x147xbf16>
    %c0_1 = arith.constant 0 : index
    %c0_2 = arith.constant 0 : index
    %1 = vector.load %arg2[%c0_1, %c0_2] : memref<147x64xbf16, #tpu.memory_space<vmem>>, vector<147x64xbf16>
    %cst = arith.constant dense<0.000000e+00> : vector<128x64xf32>
    %2 = tpu.matmul %0, %1, %cst {dimension_numbers = #tpu.dot_dimension_numbers<[1], [0], [0], [1], [0, 0, 1, 1], [], []>} : vector<128x147xbf16>, vector<147x64xbf16>, vector<128x64xf32> -> vector<128x64xf32>
    %c0_3 = arith.constant 0 : index
    %c0_4 = arith.constant 0 : index
    %3 = vector.load %arg3[%c0_3, %c0_4] : memref<1x64xf32, #tpu.memory_space<vmem>>, vector<1x64xf32>
    %4 = vector.broadcast %3 : vector<1x64xf32> to vector<128x64xf32>
    %5 = arith.addf %2, %4 : vector<128x64xf32>
    %cst_5 = arith.constant 0.000000e+00 : f32
    %6 = vector.broadcast %cst_5 : f32 to vector<128x64xf32>
    %7 = arith.maximumf %5, %6 : vector<128x64xf32>
    %8 = arith.truncf %7 : vector<128x64xf32> to vector<128x64xbf16>
    %c0_6 = arith.constant 0 : index
    %c0_7 = arith.constant 0 : index
    %9 = vector.load %arg4[%c0_6, %c0_7] : memref<128x64xbf16, #tpu.memory_space<vmem>>, vector<128x64xbf16>
    tpu.vector_store %arg4[%c0_6, %c0_7], %8 {strides = array<i32>} : memref<128x64xbf16, #tpu.memory_space<vmem>>, vector<128x64xbf16>,
    %cst_8 = arith.constant dense<0.000000e+00> : vector<64xf32>
    %10 = vector.multi_reduction <add>, %7, %cst_8 [0] : vector<128x64xf32> to vector<64xf32>
    %11 = vector.shape_cast %10 : vector<64xf32> to vector<1x64xf32>
    %c0_9 = arith.constant 0 : index
    %c0_10 = arith.constant 0 : index
    %c0_11 = arith.constant 0 : index
    %12 = vector.load %arg5[%c0_9, %c0_10, %c0_11] : memref<1x1x64xf32, #tpu.memory_space<vmem>>, vector<1x1x64xf32>
    %13 = vector.shape_cast %12 : vector<1x1x64xf32> to vector<1x64xf32>
    %14 = vector.shape_cast %11 : vector<1x64xf32> to vector<1x1x64xf32>
    tpu.vector_store %arg5[%c0_9, %c0_10, %c0_11], %14 {strides = array<i32>} : memref<1x1x64xf32, #tpu.memory_space<vmem>>, vector<1x1x64xf32>,
    %15 = arith.mulf %7, %7 : vector<128x64xf32>
    %cst_12 = arith.constant dense<0.000000e+00> : vector<64xf32>
    %16 = vector.multi_reduction <add>, %15, %cst_12 [0] : vector<128x64xf32> to vector<64xf32>
    %17 = vector.shape_cast %16 : vector<64xf32> to vector<1x64xf32>
    %c0_13 = arith.constant 0 : index
    %c0_14 = arith.constant 0 : index
    %c0_15 = arith.constant 0 : index
    %18 = vector.load %arg6[%c0_13, %c0_14, %c0_15] : memref<1x1x64xf32, #tpu.memory_space<vmem>>, vector<1x1x64xf32>
    %19 = vector.shape_cast %18 : vector<1x1x64xf32> to vector<1x64xf32>
    %20 = vector.shape_cast %17 : vector<1x64xf32> to vector<1x1x64xf32>
    tpu.vector_store %arg6[%c0_13, %c0_14, %c0_15], %20 {strides = array<i32>} : memref<1x1x64xf32, #tpu.memory_space<vmem>>, vector<1x1x64xf32>,
    return
  }
  func.func @transform_0(%arg0: i32) -> (i32, i32) {
    %c0_i32 = arith.constant 0 : i32
    %c0_i32_0 = arith.constant 0 : i32
    return %arg0, %c0_i32 : i32, i32
  }
  func.func @transform_1(%arg0: i32) -> (i32, i32) {
    %c0_i32 = arith.constant 0 : i32
    %c0_i32_0 = arith.constant 0 : i32
    %c0_i32_1 = arith.constant 0 : i32
    return %c0_i32, %c0_i32_0 : i32, i32
  }
  func.func @transform_2(%arg0: i32) -> (i32, i32) {
    %c0_i32 = arith.constant 0 : i32
    %c0_i32_0 = arith.constant 0 : i32
    %c0_i32_1 = arith.constant 0 : i32
    return %c0_i32, %c0_i32_0 : i32, i32
  }
  func.func @transform_3(%arg0: i32) -> (i32, i32) {
    %c0_i32 = arith.constant 0 : i32
    %c0_i32_0 = arith.constant 0 : i32
    return %arg0, %c0_i32 : i32, i32
  }
  func.func @transform_4(%arg0: i32) -> (i32, i32, i32) {
    %c0_i32 = arith.constant 0 : i32
    %c0_i32_0 = arith.constant 0 : i32
    %c0_i32_1 = arith.constant 0 : i32
    return %arg0, %c0_i32, %c0_i32_0 : i32, i32, i32
  }
  func.func @transform_5(%arg0: i32) -> (i32, i32, i32) {
    %c0_i32 = arith.constant 0 : i32
    %c0_i32_0 = arith.constant 0 : i32
    %c0_i32_1 = arith.constant 0 : i32
    return %arg0, %c0_i32, %c0_i32_0 : i32, i32, i32
  }
}

</mosaic_0001>

<llo_original>
// kernel: tpu_custom_call.1
$region0: #{tpu_custom_call.1}
  #allocation0 [shape = 'u32[]', space=smem, size = 0x4, offset = 0x4, fixed_abs, tag = 'smem constant byte address 0x4 - core index']
  #allocation1 [shape = 'u32[144,128]{1,0:T(1,128)}', space=vmem, size = 0x12000, scoped, tag = 'internal scratch']
  %s0 = inlined_call_operand.vmem [shape: bf16[128,147], index: 0, kind: input, shape index: {}]
  %s1 = inlined_call_operand.vmem [shape: bf16[147,64], index: 1, kind: input, shape index: {}]
  %s2 = inlined_call_operand.vmem [shape: f32[1,64], index: 2, kind: input, shape index: {}]
  %s3 = inlined_call_operand.vmem [shape: bf16[128,64], index: 3, kind: output, shape index: {0}]
  %s4 = inlined_call_operand.hbm [shape: f32[1,1,64], index: 4, kind: output, shape index: {1}]
  %s5 = inlined_call_operand.hbm [shape: f32[1,1,64], index: 5, kind: output, shape index: {2}]
  %6 = xla_tuple %s3, %s4, %s5
  %s7 = sld [smem:[#allocation0]]
  $region38: #{tpu_custom_call.1} parent=0
    _
  %s9 = ssub.s32 1, %s7
  %s10 = scalar_select 0, %s9, %s7
  $region1: #{tpu_custom_call.1} parent=0
    #allocation2 [shape = 'u8[512]{0}', space=vmem, size = 0x400, scoped, tag = 'output window, operand 1, single buffered']
    #allocation3 [shape = 's32[1]{0}', space=sflag, size = 0x4, scoped, tag = 'scoped memory for tpu_custom_call.1']
    #allocation4 [shape = 'u8[512]{0}', space=vmem, size = 0x400, scoped, tag = 'output window, operand 2, single buffered']
    #allocation5 [shape = 's32[1]{0}', space=sflag, size = 0x4, scoped, tag = 'scoped memory for tpu_custom_call.1']
    %11 = vsyncpa [#allocation3], 0
    %12 = vsyncpa [#allocation5], 0
    // Predicated region
    $region2: #{tpu_custom_call.1} parent=1 // pred_check
      _
    $region3: #{tpu_custom_call.1} parent=1 // pred_check_branch
      %14 = sbr.rel (0) target = $region5
    $region4: #{tpu_custom_call.1} parent=1 // pred_region
      _
    $region5: #{tpu_custom_call.1} parent=1 // pred_fallthru
      _
    // Predicated region
    $region6: #{tpu_custom_call.1} parent=1 // pred_check
      _
    $region7: #{tpu_custom_call.1} parent=1 // pred_check_branch
      %16 = sbr.rel (0) target = $region9
    $region8: #{tpu_custom_call.1} parent=1 // pred_region
      _
    $region9: #{tpu_custom_call.1} parent=1 // pred_fallthru
      _
    // Predicated region
    $region10: #{tpu_custom_call.1} parent=1 // pred_check
      _
    $region11: #{tpu_custom_call.1} parent=1 // pred_check_branch
      %18 = sbr.rel (0) target = $region13
    $region12: #{tpu_custom_call.1} parent=1 // pred_region
      _
    $region13: #{tpu_custom_call.1} parent=1 // pred_fallthru
      _
    %v20 = vld [vmem:[%s0] sm:$0xff]
    %v21 = vld [vmem:[%s0 + $0x8] sm:$0xff]
    %v22 = vld [vmem:[%s0 + $0x10] sm:$0xff]
    %v23 = vld [vmem:[%s0 + $0x18] sm:$0xff]
    %v24 = vld [vmem:[%s0 + $0x20] sm:$0xff]
    %v25 = vld [vmem:[%s0 + $0x28] sm:$0xff]
    %v26 = vld [vmem:[%s0 + $0x30] sm:$0xff]
    %v27 = vld [vmem:[%s0 + $0x38] sm:$0xff]
    %v28 = vld [vmem:[%s0 + $0x40] sm:$0xff]
    %v29 = vld [vmem:[%s0 + $0x48] sm:$0xff]
    %v30 = vld [vmem:[%s0 + $0x50] sm:$0xff]
    %v31 = vld [vmem:[%s0 + $0x58] sm:$0xff]
    %v32 = vld [vmem:[%s0 + $0x60] sm:$0xff]
    %v33 = vld [vmem:[%s0 + $0x68] sm:$0xff]
    %v34 = vld [vmem:[%s0 + $0x70] sm:$0xff]
    %v35 = vld [vmem:[%s0 + $0x78] sm:$0xff]
    %v36 = vld [vmem:[%s1] sm:$0xf]
    %v37 = vld [vmem:[%s1 + $0x4] sm:$0xf]
    %v38 = vld [vmem:[%s1 + $0x8] sm:$0xf]
    %v39 = vld [vmem:[%s1 + $0xc] sm:$0xf]
    %v40 = vld [vmem:[%s1 + $0x10] sm:$0xf]
    %v41 = vld [vmem:[%s1 + $0x14] sm:$0xf]
    %v42 = vld [vmem:[%s1 + $0x18] sm:$0xf]
    %v43 = vld [vmem:[%s1 + $0x1c] sm:$0xf]
    %v44 = vld [vmem:[%s1 + $0x20] sm:$0xf]
    %v45 = vld [vmem:[%s1 + $0x24] sm:$0xf]
    %v46 = vld [vmem:[%s1 + $0x28] sm:$0xf]
    %v47 = vld [vmem:[%s1 + $0x2c] sm:$0xf]
    %v48 = vld [vmem:[%s1 + $0x30] sm:$0xf]
    %v49 = vld [vmem:[%s1 + $0x34] sm:$0xf]
    %v50 = vld [vmem:[%s1 + $0x38] sm:$0xf]
    %v51 = vld [vmem:[%s1 + $0x3c] sm:$0xf]
    %v52 = vld [vmem:[%s1 + $0x40] sm:$0xf]
    %v53 = vld [vmem:[%s1 + $0x44] sm:$0xf]
    %v54 = vld [vmem:[%s1 + $0x48] sm:$0x3]
    %v55 = vld [vmem:[%s2] sm:$0x1]
    %v57 = vlaneseq
    %v58 = vshrl.u32 %v57, 7
    %v59 = vsub.s32 0, %v58
    %v60 = vrot.slane %v55, %v59
    %v78 = vunpack.c.l.b16 %v20
    %v79 = vunpack.c.h.b16 %v20
    %v80 = vunpack.c.l.b16 %v21
    %v81 = vunpack.c.h.b16 %v21
    %v82 = vunpack.c.l.b16 %v22
    %v83 = vunpack.c.h.b16 %v22
    %v84 = vunpack.c.l.b16 %v23
    %v85 = vunpack.c.h.b16 %v23
    %v86 = vunpack.c.l.b16 %v24
    %v87 = vunpack.c.h.b16 %v24
    %v88 = vunpack.c.l.b16 %v25
    %v89 = vunpack.c.h.b16 %v25
    %v90 = vunpack.c.l.b16 %v26
    %v91 = vunpack.c.h.b16 %v26
    %v92 = vunpack.c.l.b16 %v27
    %v93 = vunpack.c.h.b16 %v27
    %v94 = vunpack.c.l.b16 %v28
    %v95 = vunpack.c.h.b16 %v28
    %v96 = vunpack.c.l.b16 %v29
    %v97 = vunpack.c.h.b16 %v29
    %v98 = vunpack.c.l.b16 %v30
    %v99 = vunpack.c.h.b16 %v30
    %v100 = vunpack.c.l.b16 %v31
    %v101 = vunpack.c.h.b16 %v31
    %v102 = vunpack.c.l.b16 %v32
    %v103 = vunpack.c.h.b16 %v32
    %v104 = vunpack.c.l.b16 %v33
    %v105 = vunpack.c.h.b16 %v33
    %v106 = vunpack.c.l.b16 %v34
    %v107 = vunpack.c.h.b16 %v34
    %v108 = vunpack.c.l.b16 %v35
    %v109 = vunpack.c.h.b16 %v35
    %v110 = vpack.c.b16 %v80, %v78
    %v111 = vpack.c.b16 %v81, %v79
    %v112 = vpack.c.b16 %v84, %v82
    %v113 = vpack.c.b16 %v85, %v83
    %v114 = vpack.c.b16 %v88, %v86
    %v115 = vpack.c.b16 %v89, %v87
    %v116 = vpack.c.b16 %v92, %v90
    %v117 = vpack.c.b16 %v93, %v91
    %v118 = vpack.c.b16 %v96, %v94
    %v119 = vpack.c.b16 %v97, %v95
    %v120 = vpack.c.b16 %v100, %v98
    %v121 = vpack.c.b16 %v101, %v99
    %v122 = vpack.c.b16 %v104, %v102
    %v123 = vpack.c.b16 %v105, %v103
    %v124 = vpack.c.b16 %v108, %v106
    %v125 = vpack.c.b16 %v109, %v107
    %v153 = vunpack.c.l.b16 %v36
    %v154 = vunpack.c.l.b16 %v37
    %v155 = vunpack.c.l.b16 %v38
    %v156 = vunpack.c.l.b16 %v39
    %v157 = vunpack.c.l.b16 %v40
    %v158 = vunpack.c.l.b16 %v41
    %v159 = vunpack.c.l.b16 %v42
    %v160 = vunpack.c.l.b16 %v43
    %v161 = vunpack.c.l.b16 %v44
    %v162 = vunpack.c.l.b16 %v45
    %v163 = vunpack.c.l.b16 %v46
    %v164 = vunpack.c.l.b16 %v47
    %v165 = vunpack.c.l.b16 %v48
    %v166 = vunpack.c.l.b16 %v49
    %v167 = vunpack.c.l.b16 %v50
    %v168 = vunpack.c.l.b16 %v51
    %v169 = vunpack.c.l.b16 %v52
    %v170 = vunpack.c.l.b16 %v53
    %v171 = vunpack.c.l.b16 %v54
    %v172 = vpack.c.b16 %v154, %v153
    %v173 = vpack.c.b16 %v156, %v155
    %v174 = vpack.c.b16 %v158, %v157
    %v175 = vpack.c.b16 %v160, %v159
    %v176 = vpack.c.b16 %v162, %v161
    %v177 = vpack.c.b16 %v164, %v163
    %v178 = vpack.c.b16 %v166, %v165
    %v179 = vpack.c.b16 %v168, %v167
    %v180 = vpack.c.b16 %v170, %v169
    %v181 = vpack.c.b16 %v171, %v171
    %vm191 = vcmask 154624
    %v193 = vsel %vm191, %v111, 0
    %v196 = vsel %vm191, %v113, 0
    %v199 = vsel %vm191, %v115, 0
    %v202 = vsel %vm191, %v117, 0
    %v205 = vsel %vm191, %v119, 0
    %v208 = vsel %vm191, %v121, 0
    %v211 = vsel %vm191, %v123, 0
    %v214 = vsel %vm191, %v125, 0
    %vm216 = vcmask 1040384
    %vm217 = vcmask 1041408
    %v218 = vsel %vm216, 4294967295, 65535
    %v219 = vsel %vm217, %v218, 0
    %v221 = vand.u32 %v181, %v219
    %223 = vmatprep.subr.bf16.mxu0 0
    %224 = vmatpush1.bf16.msra.mxu0 %v172
    %225 = vmatprep.subr.bf16.mxu0 0
    %226 = vmatpush1.bf16.msra.mxu0 %v173
    %227 = vmatprep.subr.bf16.mxu0 0
    %228 = vmatpush1.bf16.msra.mxu0 %v174
    %229 = vmatprep.subr.bf16.mxu0 0
    %230 = vmatpush1.bf16.msra.mxu0 %v175
    %231 = vmatprep.subr.bf16.mxu0 0
    %232 = vmatpush1.bf16.msra.mxu0 %v176
    %233 = vmatprep.subr.bf16.mxu0 0
    %234 = vmatpush1.bf16.msra.mxu0 %v177
    %235 = vmatprep.subr.bf16.mxu0 0
    %236 = vmatpush1.bf16.msra.mxu0 %v178
    %237 = vmatprep.subr.bf16.mxu0 0
    %238 = vmatpush1.bf16.msra.mxu0 %v179
    %239 = vmatprep.subr.bf16.mxu0 0
    %240 = vmatpush1.bf16.msra.mxu0 %v180
    %241 = vmatprep.subr.bf16.mxu0 0
    %242 = vmatpush1.bf16.msra.mxu0 %v221
    %243 = vmatprep.subr.bf16.mxu0 0
    %244 = vmatpush1.bf16.msra.mxu0 0
    %245 = vmatprep.subr.bf16.mxu0 0
    %246 = vmatpush1.bf16.msra.mxu0 0
    %247 = vmatprep.subr.bf16.mxu0 0
    %248 = vmatpush1.bf16.msra.mxu0 0
    %249 = vmatprep.subr.bf16.mxu0 0
    %250 = vmatpush1.bf16.msra.mxu0 0
    %251 = vmatprep.subr.bf16.mxu0 0
    %252 = vmatpush1.bf16.msra.mxu0 0
    %253 = vmatprep.subr.bf16.mxu0 0
    %254 = vmatpush1.bf16.msra.mxu0 0
    %255 = vmatprep.mubr.bf16.mxu0 %v193
    %256 = vmatmul.mubr.bf16.gmra.mrb[0].mxu0 %v110
    %v257 = vpop.f32.mrb[0].mxu0
    %v258 = vadd.f32 %v60, %v257
    %v259 = vpop.f32.mrb[0].mxu0
    %v260 = vpop.f32.mrb[0].mxu0
    %v261 = vadd.f32 %v60, %v260
    %v262 = vpop.f32.mrb[0].mxu0
    %263 = vmatprep.mubr.bf16.mxu0 %v196
    %264 = vmatmul.mubr.bf16.gmra.mrb[0].mxu0 %v112
    %v265 = vpop.f32.mrb[0].mxu0
    %v266 = vadd.f32 %v60, %v265
    %v267 = vpop.f32.mrb[0].mxu0
    %v268 = vpop.f32.mrb[0].mxu0
    %v269 = vadd.f32 %v60, %v268
    %v270 = vpop.f32.mrb[0].mxu0
    %271 = vmatprep.mubr.bf16.mxu0 %v199
    %272 = vmatmul.mubr.bf16.gmra.mrb[0].mxu0 %v114
    %v273 = vpop.f32.mrb[0].mxu0
    %v274 = vadd.f32 %v60, %v273
    %v275 = vpop.f32.mrb[0].mxu0
    %v276 = vpop.f32.mrb[0].mxu0
    %v277 = vadd.f32 %v60, %v276
    %v278 = vpop.f32.mrb[0].mxu0
    %279 = vmatprep.mubr.bf16.mxu0 %v202
    %280 = vmatmul.mubr.bf16.gmra.mrb[0].mxu0 %v116
    %v281 = vpop.f32.mrb[0].mxu0
    %v282 = vadd.f32 %v60, %v281
    %v283 = vpop.f32.mrb[0].mxu0
    %v284 = vpop.f32.mrb[0].mxu0
    %v285 = vadd.f32 %v60, %v284
    %v286 = vpop.f32.mrb[0].mxu0
    %287 = vmatprep.mubr.bf16.mxu0 %v205
    %288 = vmatmul.mubr.bf16.gmra.mrb[0].mxu0 %v118
    %v289 = vpop.f32.mrb[0].mxu0
    %v290 = vadd.f32 %v60, %v289
    %v291 = vpop.f32.mrb[0].mxu0
    %v292 = vpop.f32.mrb[0].mxu0
    %v293 = vadd.f32 %v60, %v292
    %v294 = vpop.f32.mrb[0].mxu0
    %295 = vmatprep.mubr.bf16.mxu0 %v208
    %296 = vmatmul.mubr.bf16.gmra.mrb[0].mxu0 %v120
    %v297 = vpop.f32.mrb[0].mxu0
    %v298 = vadd.f32 %v60, %v297
    %v299 = vpop.f32.mrb[0].mxu0
    %v300 = vpop.f32.mrb[0].mxu0
    %v301 = vadd.f32 %v60, %v300
    %v302 = vpop.f32.mrb[0].mxu0
    %303 = vmatprep.mubr.bf16.mxu0 %v211
    %304 = vmatmul.mubr.bf16.gmra.mrb[0].mxu0 %v122
    %v305 = vpop.f32.mrb[0].mxu0
    %v306 = vadd.f32 %v60, %v305
    %v307 = vpop.f32.mrb[0].mxu0
    %v308 = vpop.f32.mrb[0].mxu0
    %v309 = vadd.f32 %v60, %v308
    %v310 = vpop.f32.mrb[0].mxu0
    %311 = vmatprep.mubr.bf16.mxu0 %v214
    %312 = vmatmul.mubr.bf16.gmra.mrb[0].mxu0 %v124
    %v313 = vpop.f32.mrb[0].mxu0
    %v314 = vadd.f32 %v60, %v313
    %v315 = vpop.f32.mrb[0].mxu0
    %v316 = vpop.f32.mrb[0].mxu0
    %v317 = vadd.f32 %v60, %v316
    %v318 = vpop.f32.mrb[0].mxu0
    %319 = vdwg.mxu0
    %v320 = vmax.f32 %v258, 0.0
    %v321 = vmax.f32 %v261, 0.0
    %v322 = vmax.f32 %v266, 0.0
    %v323 = vmax.f32 %v269, 0.0
    %v324 = vmax.f32 %v274, 0.0
    %v325 = vmax.f32 %v277, 0.0
    %v326 = vmax.f32 %v282, 0.0
    %v327 = vmax.f32 %v285, 0.0
    %v328 = vmax.f32 %v290, 0.0
    %v329 = vmax.f32 %v293, 0.0
    %v330 = vmax.f32 %v298, 0.0
    %v331 = vmax.f32 %v301, 0.0
    %v332 = vmax.f32 %v306, 0.0
    %v333 = vmax.f32 %v309, 0.0
    %v334 = vmax.f32 %v314, 0.0
    %v335 = vmax.f32 %v317, 0.0
    %v336 = vpack.c.bf16 %v321, %v320
    %v337 = vpack.c.bf16 %v323, %v322
    %v338 = vpack.c.bf16 %v325, %v324
    %v339 = vpack.c.bf16 %v327, %v326
    %v340 = vpack.c.bf16 %v329, %v328
    %v341 = vpack.c.bf16 %v331, %v330
    %v342 = vpack.c.bf16 %v333, %v332
    %v343 = vpack.c.bf16 %v335, %v334
    %v352 = vunpack.c.l.b16 %v336
    %v353 = vunpack.c.h.b16 %v336
    %v354 = vunpack.c.l.b16 %v337
    %v355 = vunpack.c.h.b16 %v337
    %v356 = vunpack.c.l.b16 %v338
    %v357 = vunpack.c.h.b16 %v338
    %v358 = vunpack.c.l.b16 %v339
    %v359 = vunpack.c.h.b16 %v339
    %v360 = vunpack.c.l.b16 %v340
    %v361 = vunpack.c.h.b16 %v340
    %v362 = vunpack.c.l.b16 %v341
    %v363 = vunpack.c.h.b16 %v341
    %v364 = vunpack.c.l.b16 %v342
    %v365 = vunpack.c.h.b16 %v342
    %v366 = vunpack.c.l.b16 %v343
    %v367 = vunpack.c.h.b16 %v343
    %v368 = vpack.c.b16 %v352, %v352
    %v369 = vpack.c.b16 %v353, %v353
    %v370 = vpack.c.b16 %v354, %v354
    %v371 = vpack.c.b16 %v355, %v355
    %v372 = vpack.c.b16 %v356, %v356
    %v373 = vpack.c.b16 %v357, %v357
    %v374 = vpack.c.b16 %v358, %v358
    %v375 = vpack.c.b16 %v359, %v359
    %v376 = vpack.c.b16 %v360, %v360
    %v377 = vpack.c.b16 %v361, %v361
    %v378 = vpack.c.b16 %v362, %v362
    %v379 = vpack.c.b16 %v363, %v363
    %v380 = vpack.c.b16 %v364, %v364
    %v381 = vpack.c.b16 %v365, %v365
    %v382 = vpack.c.b16 %v366, %v366
    %v383 = vpack.c.b16 %v367, %v367
    %vm400 = vcmask 519168
    %401 = vst.msk [vmem:[%s3] sm:$0xf] %vm400, %v368
    %402 = vst.msk [vmem:[%s3 + $0x4] sm:$0xf] %vm400, %v369
    %403 = vst.msk [vmem:[%s3 + $0x8] sm:$0xf] %vm400, %v370
    %404 = vst.msk [vmem:[%s3 + $0xc] sm:$0xf] %vm400, %v371
    %405 = vst.msk [vmem:[%s3 + $0x10] sm:$0xf] %vm400, %v372
    %406 = vst.msk [vmem:[%s3 + $0x14] sm:$0xf] %vm400, %v373
    %407 = vst.msk [vmem:[%s3 + $0x18] sm:$0xf] %vm400, %v374
    %408 = vst.msk [vmem:[%s3 + $0x1c] sm:$0xf] %vm400, %v375
    %409 = vst.msk [vmem:[%s3 + $0x20] sm:$0xf] %vm400, %v376
    %410 = vst.msk [vmem:[%s3 + $0x24] sm:$0xf] %vm400, %v377
    %411 = vst.msk [vmem:[%s3 + $0x28] sm:$0xf] %vm400, %v378
    %412 = vst.msk [vmem:[%s3 + $0x2c] sm:$0xf] %vm400, %v379
    %413 = vst.msk [vmem:[%s3 + $0x30] sm:$0xf] %vm400, %v380
    %414 = vst.msk [vmem:[%s3 + $0x34] sm:$0xf] %vm400, %v381
    %415 = vst.msk [vmem:[%s3 + $0x38] sm:$0xf] %vm400, %v382
    %416 = vst.msk [vmem:[%s3 + $0x3c] sm:$0xf] %vm400, %v383
    %vm417 = vcmask 523264
    %v418 = vsel %vm417, %v320, 0.0
    %v419 = vsel %vm417, %v321, 0.0
    %v420 = vadd.f32 %v418, %v419
    %v421 = vsel %vm417, %v322, 0.0
    %v422 = vadd.f32 %v420, %v421
    %v423 = vsel %vm417, %v323, 0.0
    %v424 = vadd.f32 %v422, %v423
    %v425 = vsel %vm417, %v324, 0.0
    %v426 = vadd.f32 %v424, %v425
    %v427 = vsel %vm417, %v325, 0.0
    %v428 = vadd.f32 %v426, %v427
    %v429 = vsel %vm417, %v326, 0.0
    %v430 = vadd.f32 %v428, %v429
    %v431 = vsel %vm417, %v327, 0.0
    %v432 = vadd.f32 %v430, %v431
    %v433 = vsel %vm417, %v328, 0.0
    %v434 = vadd.f32 %v432, %v433
    %v435 = vsel %vm417, %v329, 0.0
    %v436 = vadd.f32 %v434, %v435
    %v437 = vsel %vm417, %v330, 0.0
    %v438 = vadd.f32 %v436, %v437
    %v439 = vsel %vm417, %v331, 0.0
    %v440 = vadd.f32 %v438, %v439
    %v441 = vsel %vm417, %v332, 0.0
    %v442 = vadd.f32 %v440, %v441
    %v443 = vsel %vm417, %v333, 0.0
    %v444 = vadd.f32 %v442, %v443
    %v445 = vsel %vm417, %v334, 0.0
    %v446 = vadd.f32 %v444, %v445
    %v447 = vsel %vm417, %v335, 0.0
    %v448 = vadd.f32 %v446, %v447
    %v449 = vrot.slane %v448, 4
    %v450 = vadd.f32 %v448, %v449
    %v451 = vrot.slane %v450, 2
    %v452 = vadd.f32 %v450, %v451
    %v453 = vrot.slane %v452, 1
    %v454 = vadd.f32 %v452, %v453
    %vm455 = vcmask 516096
    %456 = vst.msk [vmem:[#allocation2] sm:$0x1] %vm455, %v454
    %v457 = vmul.f32 %v320, %v320
    %v458 = vmul.f32 %v321, %v321
    %v459 = vmul.f32 %v322, %v322
    %v460 = vmul.f32 %v323, %v323
    %v461 = vmul.f32 %v324, %v324
    %v462 = vmul.f32 %v325, %v325
    %v463 = vmul.f32 %v326, %v326
    %v464 = vmul.f32 %v327, %v327
    %v465 = vmul.f32 %v328, %v328
    %v466 = vmul.f32 %v329, %v329
    %v467 = vmul.f32 %v330, %v330
    %v468 = vmul.f32 %v331, %v331
    %v469 = vmul.f32 %v332, %v332
    %v470 = vmul.f32 %v333, %v333
    %v471 = vmul.f32 %v334, %v334
    %v472 = vmul.f32 %v335, %v335
    %v473 = vsel %vm417, %v457, 0.0
    %v474 = vsel %vm417, %v458, 0.0
    %v475 = vadd.f32 %v473, %v474
    %v476 = vsel %vm417, %v459, 0.0
    %v477 = vadd.f32 %v475, %v476
    %v478 = vsel %vm417, %v460, 0.0
    %v479 = vadd.f32 %v477, %v478
    %v480 = vsel %vm417, %v461, 0.0
    %v481 = vadd.f32 %v479, %v480
    %v482 = vsel %vm417, %v462, 0.0
    %v483 = vadd.f32 %v481, %v482
    %v484 = vsel %vm417, %v463, 0.0
    %v485 = vadd.f32 %v483, %v484
    %v486 = vsel %vm417, %v464, 0.0
    %v487 = vadd.f32 %v485, %v486
    %v488 = vsel %vm417, %v465, 0.0
    %v489 = vadd.f32 %v487, %v488
    %v490 = vsel %vm417, %v466, 0.0
    %v491 = vadd.f32 %v489, %v490
    %v492 = vsel %vm417, %v467, 0.0
    %v493 = vadd.f32 %v491, %v492
    %v494 = vsel %vm417, %v468, 0.0
    %v495 = vadd.f32 %v493, %v494
    %v496 = vsel %vm417, %v469, 0.0
    %v497 = vadd.f32 %v495, %v496
    %v498 = vsel %vm417, %v470, 0.0
    %v499 = vadd.f32 %v497, %v498
    %v500 = vsel %vm417, %v471, 0.0
    %v501 = vadd.f32 %v499, %v500
    %v502 = vsel %vm417, %v472, 0.0
    %v503 = vadd.f32 %v501, %v502
    %v504 = vrot.slane %v503, 4
    %v505 = vadd.f32 %v503, %v504
    %v506 = vrot.slane %v505, 2
    %v507 = vadd.f32 %v505, %v506
    %v508 = vrot.slane %v507, 1
    %v509 = vadd.f32 %v507, %v508
    %510 = vst.msk [vmem:[#allocation4] sm:$0x1] %vm455, %v509
    // Predicated region
    $region14: #{tpu_custom_call.1} parent=1 // pred_check
      _
    $region15: #{tpu_custom_call.1} parent=1 // pred_check_branch
      %512 = sbr.rel (0) target = $region17
    $region16: #{tpu_custom_call.1} parent=1 // pred_region
      _
    $region17: #{tpu_custom_call.1} parent=1 // pred_fallthru
      _
    // Predicated region
    $region18: #{tpu_custom_call.1} parent=1 // pred_check
      _
    $region19: #{tpu_custom_call.1} parent=1 // pred_check_branch
      %514 = sbr.rel (0) target = $region21
    $region20: #{tpu_custom_call.1} parent=1 // pred_region
      %s516 = ssub.s32 16, 16
      %517 = vsyncadd [#allocation3], %s516
      %s519 = sshll.u32 [#allocation2], 4
      %s520 = int_to_ptr.vmem [resolvable:$true] %s519
      %522 = dma.vmem_to_hbm [thread:$0]  %s520, 16, %s4, [#allocation3]
    $region21: #{tpu_custom_call.1} parent=1 // pred_fallthru
      _
    // Predicated region
    $region22: #{tpu_custom_call.1} parent=1 // pred_check
      _
    $region23: #{tpu_custom_call.1} parent=1 // pred_check_branch
      %524 = sbr.rel (0) target = $region25
    $region24: #{tpu_custom_call.1} parent=1 // pred_region
      %s526 = ssub.s32 16, 16
      %527 = vsyncadd [#allocation5], %s526
      %s529 = sshll.u32 [#allocation4], 4
      %s530 = int_to_ptr.vmem [resolvable:$true] %s529
      %532 = dma.vmem_to_hbm [thread:$0]  %s530, 16, %s5, [#allocation5]
    $region25: #{tpu_custom_call.1} parent=1 // pred_fallthru
      _
    // Predicated region
    $region26: #{tpu_custom_call.1} parent=1 // pred_check
      _
    $region27: #{tpu_custom_call.1} parent=1 // pred_check_branch
      %534 = sbr.rel (0) target = $region29
    $region28: #{tpu_custom_call.1} parent=1 // pred_region
      _
    $region29: #{tpu_custom_call.1} parent=1 // pred_fallthru
      _
    // Predicated region
    $region30: #{tpu_custom_call.1} parent=1 // pred_check
      _
    $region31: #{tpu_custom_call.1} parent=1 // pred_check_branch
      %536 = sbr.rel (0) target = $region33
    $region32: #{tpu_custom_call.1} parent=1 // pred_region
      %537 = dma.done [#allocation3], 16
    $region33: #{tpu_custom_call.1} parent=1 // pred_fallthru
      _
    // Predicated region
    $region34: #{tpu_custom_call.1} parent=1 // pred_check
      _
    $region35: #{tpu_custom_call.1} parent=1 // pred_check_branch
      %539 = sbr.rel (0) target = $region37
    $region36: #{tpu_custom_call.1} parent=1 // pred_region
      %540 = dma.done [#allocation5], 16
    $region37: #{tpu_custom_call.1} parent=1 // pred_fallthru
      _
    %541 = vsyncpa [#allocation3], 1
    %542 = vsyncpa [#allocation5], 1

</llo_original>
